<compile_context>
chip_gen: v6e
topology: v6e:2x2x1
jax: 0.10.0
libtpu: 0.0.40
codegen_flags: <defaults>
</compile_context>

<pallas_src>
import functools

import jax
import jax.numpy as jnp
from jax import lax
from jax.experimental import pallas as pl
from jax.experimental.pallas import tpu as pltpu


def _ce_kernel(logits_ref, target_ref, out_ref, *, n_rows, tile_n,
               tiles_per_core, inv_n):
    """One batch tile of mean cross-entropy, accumulated on-chip.

    logits_ref : [tile_n, C]   input dtype (f32 or bf16), upcast in-register
    target_ref : [tile_n, 1]   int32 class ids
    out_ref    : [1, 8, 128]   f32 per-core accumulator (resident across steps)
    """
    core = pl.program_id(0)
    step = pl.program_id(1)

    @pl.when(step == 0)
    def _():
        out_ref[...] = jnp.zeros_like(out_ref)

    logits = logits_ref[...].astype(jnp.float32)                # [T, C] f32
    tgt = target_ref[...]                                       # [T, 1] i32
    t, c = logits.shape

    # Numerically-stable logsumexp. The target logit is gathered from
    # `shifted`, so the row max cancels in (lse - tgt) and never needs to be
    # re-added (saves one [T, C]-wide VPU pass).
    row_max = jnp.max(logits, axis=-1, keepdims=True)           # [T, 1]
    shifted = logits - row_max                                  # [T, C]
    lse_shifted = jnp.log(jnp.sum(jnp.exp(shifted), axis=-1, keepdims=True))

    # Gather shifted[i, target[i]] via one-hot select (no real gather on TPU).
    col_ids = lax.broadcasted_iota(jnp.int32, (t, c), 1)        # [T, C]
    tgt_shifted = jnp.sum(jnp.where(col_ids == tgt, shifted, 0.0),
                          axis=-1, keepdims=True)               # [T, 1]

    per_example = lse_shifted - tgt_shifted                     # [T, 1]

    # Mask rows past the true batch size. This also zeroes whole logical
    # tiles that only exist because of the per-core grid rounding (their
    # unclamped tile index starts at or beyond n_rows).
    tile_idx = core * tiles_per_core + step                     # unclamped
    row_ids = tile_idx * tile_n + lax.broadcasted_iota(jnp.int32, (t, 1), 0)
    per_example = jnp.where(row_ids < n_rows, per_example, 0.0)

    partial = jnp.sum(per_example) * jnp.float32(inv_n)         # scalar
    # Accumulate into the resident, lane-dense (8,128)-aligned output block.
    out_ref[...] += jnp.broadcast_to(partial, out_ref.shape)


def _num_tensorcores():
    """2 TensorCores per chip on v7x, 1 on v5e/v6e (detection failure -> 1)."""
    try:
        kind = jax.devices()[0].device_kind.lower()
    except Exception:
        return 1
    if "v7" in kind or "tpu7" in kind:
        return 2
    return 1


def _pick_tile_n(n, c, in_itemsize):
    """VMEM-budgeted batch tile.

    Footprint per row ~= 2 (double-buffered) * c_pad * in_itemsize for the
    streamed input block plus ~4 f32 [row, c_pad] temporaries in the body.
    Budget ~24 MiB -> fits v7x's scoped/physical VMEM with margin; capped at
    8192 rows (roofline-saturating already for C~64).
    """
    c_pad = ((c + 127) // 128) * 128
    per_row = 2 * c_pad * in_itemsize + 4 * c_pad * 4
    budget = 24 * 1024 * 1024
    tile = min(8192, max(8, budget // max(per_row, 1)))
    if tile >= n:
        return n                                  # full-dim block always legal
    sub = max(8, 32 // max(in_itemsize, 1))       # 8 f32 / 16 bf16 / 32 int8
    tile = max(sub, (tile // sub) * sub)
    return min(tile, n)


def cross_entropy_loss(logits, target, *, tile_n=None, num_cores=None):
    """logits: [N, C] float (f32/bf16); target: [N] int class ids. Returns scalar."""
    n, c = logits.shape
    in_itemsize = jnp.dtype(logits.dtype).itemsize

    if tile_n is None:
        tile_n = _pick_tile_n(n, c, in_itemsize)
    else:
        if tile_n >= n:
            tile_n = n
        else:
            sub = max(8, 32 // max(in_itemsize, 1))
            tile_n = max(sub, (tile_n // sub) * sub)
            tile_n = min(tile_n, n)

    num_tiles = -(-n // tile_n)
    if num_cores is None:
        num_cores = _num_tensorcores()
    num_cores = max(1, min(num_cores, num_tiles))
    tiles_per_core = -(-num_tiles // num_cores)

    target_2d = target.astype(jnp.int32).reshape(n, 1)

    # Clamp logical-tile index so the DMA never walks past the array; excess
    # logical tiles are fully masked inside the kernel.
    def logits_map(ci, si):
        idx = jnp.minimum(ci * tiles_per_core + si, num_tiles - 1)
        return (idx, 0)

    def target_map(ci, si):
        idx = jnp.minimum(ci * tiles_per_core + si, num_tiles - 1)
        return (idx, 0)

    kernel = functools.partial(
        _ce_kernel, n_rows=n, tile_n=tile_n,
        tiles_per_core=tiles_per_core, inv_n=1.0 / n)

    partials = pl.pallas_call(
        kernel,
        out_shape=jax.ShapeDtypeStruct((num_cores, 8, 128), jnp.float32),
        grid=(num_cores, tiles_per_core),
        in_specs=[
            pl.BlockSpec((tile_n, c), logits_map),    # streamed logits rows
            pl.BlockSpec((tile_n, 1), target_map),    # matching targets
        ],
        out_specs=pl.BlockSpec((1, 8, 128), lambda ci, si: (ci, 0, 0)),
        compiler_params=pltpu.CompilerParams(
            dimension_semantics=("parallel", "arbitrary"),
            vmem_limit_bytes=48 * 1024 * 1024),
    )(logits, target_2d)

    if num_cores == 1:
        return partials[0, 0, 0]
    # v7x: tiny 2-element reduce across the per-core accumulators.
    return jnp.sum(partials[:, 0, 0])


if __name__ == "__main__":
    # FEMNIST has 62 classes; small batch, small tiles chosen to exercise both
    # grid axes (cores x tiles) and the masking of the overhanging last tile.
    N, C = 64, 62
    key = jax.random.PRNGKey(0)
    k_logits, k_target = jax.random.split(key)

    logits = jax.random.normal(k_logits, (N, C), dtype=jnp.float32)
    target = jax.random.randint(k_target, (N,), 0, C, dtype=jnp.int32)

    def ref_ce(lg, tg):
        log_probs = jax.nn.log_softmax(lg.astype(jnp.float32), axis=-1)
        return -jnp.mean(jnp.take_along_axis(log_probs, tg[:, None], axis=-1))

    # Case 1: f32 logits, multi-tile grid (forces >1 tile per core).
    loss = cross_entropy_loss(logits, target, tile_n=16)
    jax.block_until_ready(loss)
    assert jnp.allclose(loss, ref_ce(logits, target), atol=1e-5, rtol=1e-5), loss

    # Case 2: batch not divisible by the tile (exercises row masking and the
    # clamped index_map for excess logical tiles).
    N2 = 50
    loss2 = cross_entropy_loss(logits[:N2], target[:N2], tile_n=16)
    jax.block_until_ready(loss2)
    assert jnp.allclose(loss2, ref_ce(logits[:N2], target[:N2]),
                        atol=1e-5, rtol=1e-5), loss2

    # Case 3: bf16 logits streamed as bf16, upcast inside the kernel.
    logits_bf16 = logits.astype(jnp.bfloat16)
    loss3 = cross_entropy_loss(logits_bf16, target, tile_n=16)
    jax.block_until_ready(loss3)
    assert jnp.allclose(loss3, ref_ce(logits_bf16, target),
                        atol=1e-4, rtol=1e-4), loss3

    # Case 4: default (VMEM-budgeted) tile heuristic — single big tile here.
    loss4 = cross_entropy_loss(logits, target)
    jax.block_until_ready(loss4)
    assert jnp.allclose(loss4, ref_ce(logits, target), atol=1e-5, rtol=1e-5), loss4

    print("KERNEL_OK")
</pallas_src>

<mosaic_0001>
module attributes {stable_mosaic.version = 11 : i64} {
  func.func @_ce_kernel(%arg0: i32, %arg1: i32, %arg2: memref<16x62xf32, #tpu.memory_space<vmem>>, %arg3: memref<16x1xi32, #tpu.memory_space<vmem>>, %arg4: memref<1x8x128xf32, #tpu.memory_space<vmem>>) attributes {dimension_semantics = [#tpu.dimension_semantics<parallel>, #tpu.dimension_semantics<arbitrary>], iteration_bounds = array<i64: 1, 4>, scalar_prefetch = 0 : i64, scratch_operands = 0 : i64, tpu.core_type = #tpu.core_type<tc>, window_params = [{transform_indices = @transform_0, window_bounds = array<i64: 16, 62>}, {transform_indices = @transform_1, window_bounds = array<i64: 16, 1>}, {transform_indices = @transform_2, window_bounds = array<i64: 1, 8, 128>}]} {
    %c0_i32 = arith.constant 0 : i32
    %0 = arith.cmpi eq, %arg1, %c0_i32 : i32
    %1 = arith.extui %0 : i1 to i32
    %c0_i32_0 = arith.constant 0 : i32
    %2 = arith.cmpi ne, %1, %c0_i32_0 : i32
    scf.if %2 {
      %cst_16 = arith.constant 0.000000e+00 : f32
      %40 = vector.broadcast %cst_16 : f32 to vector<1x8x128xf32>
      %c0_17 = arith.constant 0 : index
      %c0_18 = arith.constant 0 : index
      %c0_19 = arith.constant 0 : index
      %41 = vector.load %arg4[%c0_17, %c0_18, %c0_19] : memref<1x8x128xf32, #tpu.memory_space<vmem>>, vector<1x8x128xf32>
      tpu.vector_store %arg4[%c0_17, %c0_18, %c0_19], %40 {strides = array<i32>} : memref<1x8x128xf32, #tpu.memory_space<vmem>>, vector<1x8x128xf32>,
    } else {
    }
    %c0 = arith.constant 0 : index
    %c0_1 = arith.constant 0 : index
    %3 = vector.load %arg2[%c0, %c0_1] : memref<16x62xf32, #tpu.memory_space<vmem>>, vector<16x62xf32>
    %c0_2 = arith.constant 0 : index
    %c0_3 = arith.constant 0 : index
    %4 = vector.load %arg3[%c0_2, %c0_3] : memref<16x1xi32, #tpu.memory_space<vmem>>, vector<16x1xi32>
    %cst = arith.constant dense<0xFF800000> : vector<16xf32>
    %5 = vector.multi_reduction <maximumf>, %3, %cst [1] : vector<16x62xf32> to vector<16xf32>
    %6 = vector.shape_cast %5 : vector<16xf32> to vector<16x1xf32>
    %7 = vector.broadcast %6 : vector<16x1xf32> to vector<16x62xf32>
    %8 = arith.subf %3, %7 : vector<16x62xf32>
    %9 = math.exp %8 : vector<16x62xf32>
    %cst_4 = arith.constant dense<0.000000e+00> : vector<16xf32>
    %10 = vector.multi_reduction <add>, %9, %cst_4 [1] : vector<16x62xf32> to vector<16xf32>
    %11 = vector.shape_cast %10 : vector<16xf32> to vector<16x1xf32>
    %12 = math.log %11 : vector<16x1xf32>
    %13 = tpu.iota {dimensions = array<i32: 1>} : vector<16x62xi32>
    %14 = vector.broadcast %4 : vector<16x1xi32> to vector<16x62xi32>
    %15 = arith.cmpi eq, %13, %14 : vector<16x62xi32>
    %cst_5 = arith.constant 0.000000e+00 : f32
    %16 = vector.broadcast %cst_5 : f32 to vector<16x62xf32>
    %17 = arith.select %15, %8, %16 : vector<16x62xi1>, vector<16x62xf32>
    %cst_6 = arith.constant dense<0.000000e+00> : vector<16xf32>
    %18 = vector.multi_reduction <add>, %17, %cst_6 [1] : vector<16x62xf32> to vector<16xf32>
    %19 = vector.shape_cast %18 : vector<16xf32> to vector<16x1xf32>
    %20 = arith.subf %12, %19 : vector<16x1xf32>
    %c4_i32 = arith.constant 4 : i32
    %21 = arith.muli %arg0, %c4_i32 : i32
    %22 = arith.addi %21, %arg1 : i32
    %c16_i32 = arith.constant 16 : i32
    %23 = arith.muli %22, %c16_i32 : i32
    %24 = tpu.iota {dimensions = array<i32: 0>} : vector<16x1xi32>
    %25 = vector.broadcast %23 : i32 to vector<16x1xi32>
    %26 = arith.addi %25, %24 : vector<16x1xi32>
    %c64_i32 = arith.constant 64 : i32
    %27 = vector.broadcast %c64_i32 : i32 to vector<16x1xi32>
    %28 = arith.cmpi slt, %26, %27 : vector<16x1xi32>
    %cst_7 = arith.constant 0.000000e+00 : f32
    %29 = vector.broadcast %cst_7 : f32 to vector<16x1xf32>
    %30 = arith.select %28, %20, %29 : vector<16x1xi1>, vector<16x1xf32>
    %31 = vector.shape_cast %30 : vector<16x1xf32> to vector<1x16x1xf32>
    %cst_8 = arith.constant dense<0.000000e+00> : vector<1xf32>
    %32 = vector.multi_reduction <add>, %31, %cst_8 [1, 2] : vector<1x16x1xf32> to vector<1xf32>
    %33 = vector.shape_cast %32 : vector<1xf32> to vector<1x1x1xf32>
    %34 = vector.extract %33[0, 0, 0] : f32 from vector<1x1x1xf32>
    %cst_9 = arith.constant 1.562500e-02 : f32
    %35 = arith.mulf %34, %cst_9 : f32
    %c0_10 = arith.constant 0 : index
    %c0_11 = arith.constant 0 : index
    %c0_12 = arith.constant 0 : index
    %36 = vector.load %arg4[%c0_10, %c0_11, %c0_12] : memref<1x8x128xf32, #tpu.memory_space<vmem>>, vector<1x8x128xf32>
    %37 = vector.broadcast %35 : f32 to vector<1x8x128xf32>
    %38 = arith.addf %36, %37 : vector<1x8x128xf32>
    %c0_13 = arith.constant 0 : index
    %c0_14 = arith.constant 0 : index
    %c0_15 = arith.constant 0 : index
    %39 = vector.load %arg4[%c0_13, %c0_14, %c0_15] : memref<1x8x128xf32, #tpu.memory_space<vmem>>, vector<1x8x128xf32>
    tpu.vector_store %arg4[%c0_13, %c0_14, %c0_15], %38 {strides = array<i32>} : memref<1x8x128xf32, #tpu.memory_space<vmem>>, vector<1x8x128xf32>,
    return
  }
  func.func @transform_0(%arg0: i32, %arg1: i32) -> (i32, i32) {
    %c4_i32 = arith.constant 4 : i32
    %0 = arith.muli %arg0, %c4_i32 : i32
    %1 = arith.addi %0, %arg1 : i32
    %c3_i32 = arith.constant 3 : i32
    %2 = arith.minsi %1, %c3_i32 : i32
    %c0_i32 = arith.constant 0 : i32
    %c0_i32_0 = arith.constant 0 : i32
    return %2, %c0_i32 : i32, i32
  }
  func.func @transform_1(%arg0: i32, %arg1: i32) -> (i32, i32) {
    %c4_i32 = arith.constant 4 : i32
    %0 = arith.muli %arg0, %c4_i32 : i32
    %1 = arith.addi %0, %arg1 : i32
    %c3_i32 = arith.constant 3 : i32
    %2 = arith.minsi %1, %c3_i32 : i32
    %c0_i32 = arith.constant 0 : i32
    %c0_i32_0 = arith.constant 0 : i32
    return %2, %c0_i32 : i32, i32
  }
  func.func @transform_2(%arg0: i32, %arg1: i32) -> (i32, i32, i32) {
    %c0_i32 = arith.constant 0 : i32
    %c0_i32_0 = arith.constant 0 : i32
    %c0_i32_1 = arith.constant 0 : i32
    return %arg0, %c0_i32, %c0_i32_0 : i32, i32, i32
  }
}

</mosaic_0001>

<llo_original>
// kernel: tpu_custom_call.1
$region0: #{tpu_custom_call.1}
  #allocation0 [shape = 'u32[]', space=smem, size = 0x4, offset = 0x4, fixed_abs, tag = 'smem constant byte address 0x4 - core index']
  #allocation1 [shape = 'u32[144,128]{1,0:T(1,128)}', space=vmem, size = 0x12000, scoped, tag = 'internal scratch']
  %s0 = inlined_call_operand.vmem [shape: f32[64,62], index: 0, kind: input, shape index: {}]
  %s1 = inlined_call_operand.vmem [shape: s32[64,1], index: 1, kind: input, shape index: {}]
  %s2 = inlined_call_operand.hbm [shape: f32[1,8,128], index: 2, kind: output, shape index: {}]
  %s3 = sld [smem:[#allocation0]]
  $region45: #{tpu_custom_call.1} parent=0
    _
  %s5 = ssub.s32 1, %s3
  %s6 = scalar_select 0, %s5, %s3
  $region1: #{tpu_custom_call.1} parent=0
    #allocation2 [shape = 'u8[4096]{0}', space=vmem, size = 0x1000, scoped, tag = 'output window, operand 0, single buffered']
    #allocation3 [shape = 's32[2]{0}', space=sflag, size = 0x8, scoped, tag = 'scoped memory for tpu_custom_call.1']
    %7 = vsyncpa [#allocation3], 0
    loop: start=0, step=1, limit=6
    $region2: #{tpu_custom_call.1} parent=1 // loop_pre_header
      _
    $region3: #{tpu_custom_call.1} parent=1 // loop_header
      %s9 = sphi 0, %s13
      %p10 = scmp.ge.s32.totalorder %s9, 6
      %s16 = sphi 0, %s28
      %s17 = sphi 0, %s24
      %s18 = sphi 0, %s16
      %s19 = sphi 0, %s17
      %s20 = sphi 0, %s18
      %s21 = sphi 0, %s19
      %s39 = sphi 0, %s41
      %s42 = sphi 0, %s39
      %s43 = sphi 0, %s42
      %s59 = sphi 0, %s43
      %s73 = sphi 0, %s75
      %s76 = sphi 0, %s73
      %s77 = sphi 0, %s76
      %s93 = sphi 0, %s77
      %s99 = sphi 0, %s101
      %s102 = sphi 0, %s99
      %s103 = sphi 0, %s102
      %s119 = sphi 0, %s103
    $region4: #{tpu_custom_call.1} parent=1 // loop_header_branch
      %12 = sbr.rel (%p10) target = $region8
    $region5: #{tpu_custom_call.1} parent=1 // loop_body
      %s14 = ssub.s32 %s9, 1
      %s15 = ssub.s32 %s9, 2
      %s22 = sadd.s32 1, %s17
      %p23 = scmp.ge.s32.totalorder %s22, 4
      %s24 = scalar_select %p23, 0, %s22
      %s25 = sadd.s32 1, %s16
      %s26 = scalar_select %p23, %s25, %s16
      %p27 = scmp.ge.s32.totalorder %s26, 1
      %s28 = scalar_select %p27, 0, %s26
      %s29 = smul.u32 %s16, 4
      %s30 = sadd.s32 %s29, %s17
      %p31 = scmp.lt.s32.totalorder %s30, 3
      %s32 = scalar_select %p31, %s30, 3
      %s33 = smul.u32 %s28, 4
      %s34 = sadd.s32 %s33, %s24
      %p35 = scmp.lt.s32.totalorder %s34, 3
      %s36 = scalar_select %p35, %s34, 3
      %s37 = ssub.s32 %s32, %s36
      %p38 = scmp.eq.s32.totalorder %s37, 0
      %s40 = sadd.s32 %s39, 1
      %s41 = scalar_select %p38, %s39, %s40
      %p44 = pneg %p38
      %p45 = scmp.eq.s32.totalorder %s9, 3
      %p46 = por %p44, %p45
      %p47 = scmp.ne.s32.totalorder %s39, %s42
      %p48 = scmp.eq.s32.totalorder %s9, 0
      %p49 = por %p47, %p48
      %p50 = scmp.ne.s32.totalorder %s39, %s42
      %p51 = scmp.eq.s32.totalorder %s14, 3
      %p52 = por %p50, %p51
      %p53 = scmp.ne.s32.totalorder %s42, %s43
      %p54 = scmp.eq.s32.totalorder %s14, 0
      %p55 = por %p53, %p54
      %p56 = scmp.ne.s32.totalorder %s42, %s43
      %p57 = scmp.eq.s32.totalorder %s15, 3
      %p58 = por %p56, %p57
      %p60 = scmp.ne.s32.totalorder %s43, %s59
      %p61 = scmp.eq.s32.totalorder %s15, 0
      %p62 = por %p60, %p61
      %s63 = smul.u32 %s16, 4
      %s64 = sadd.s32 %s63, %s17
      %p65 = scmp.lt.s32.totalorder %s64, 3
      %s66 = scalar_select %p65, %s64, 3
      %s67 = smul.u32 %s28, 4
      %s68 = sadd.s32 %s67, %s24
      %p69 = scmp.lt.s32.totalorder %s68, 3
      %s70 = scalar_select %p69, %s68, 3
      %s71 = ssub.s32 %s66, %s70
      %p72 = scmp.eq.s32.totalorder %s71, 0
      %s74 = sadd.s32 %s73, 1
      %s75 = scalar_select %p72, %s73, %s74
      %p78 = pneg %p72
      %p79 = scmp.eq.s32.totalorder %s9, 3
      %p80 = por %p78, %p79
      %p81 = scmp.ne.s32.totalorder %s73, %s76
      %p82 = scmp.eq.s32.totalorder %s9, 0
      %p83 = por %p81, %p82
      %p84 = scmp.ne.s32.totalorder %s73, %s76
      %p85 = scmp.eq.s32.totalorder %s14, 3
      %p86 = por %p84, %p85
      %p87 = scmp.ne.s32.totalorder %s76, %s77
      %p88 = scmp.eq.s32.totalorder %s14, 0
      %p89 = por %p87, %p88
      %p90 = scmp.ne.s32.totalorder %s76, %s77
      %p91 = scmp.eq.s32.totalorder %s15, 3
      %p92 = por %p90, %p91
      %p94 = scmp.ne.s32.totalorder %s77, %s93
      %p95 = scmp.eq.s32.totalorder %s15, 0
      %p96 = por %p94, %p95
      %s97 = ssub.s32 %s16, %s28
      %p98 = scmp.eq.s32.totalorder %s97, 0
      %s100 = sadd.s32 %s99, 1
      %s101 = scalar_select %p98, %s99, %s100
      %p104 = pneg %p98
      %p105 = scmp.eq.s32.totalorder %s9, 3
      %p106 = por %p104, %p105
      %p107 = scmp.ne.s32.totalorder %s99, %s102
      %p108 = scmp.eq.s32.totalorder %s9, 0
      %p109 = por %p107, %p108
      %p110 = scmp.ne.s32.totalorder %s99, %s102
      %p111 = scmp.eq.s32.totalorder %s14, 3
      %p112 = por %p110, %p111
      %p113 = scmp.ne.s32.totalorder %s102, %s103
      %p114 = scmp.eq.s32.totalorder %s14, 0
      %p115 = por %p113, %p114
      %p116 = scmp.ne.s32.totalorder %s102, %s103
      %p117 = scmp.eq.s32.totalorder %s15, 3
      %p118 = por %p116, %p117
      %p120 = scmp.ne.s32.totalorder %s103, %s119
      %p121 = scmp.eq.s32.totalorder %s15, 0
      %p122 = por %p120, %p121
      %p123 = scmp.le.s32.totalorder 1, %s9
      %p124 = scmp.lt.s32.totalorder %s9, 5
      %p125 = pnand %p123, %p124
      %p126 = pneg %p125
      // Predicated region
      $region9: #{tpu_custom_call.1} parent=5 // pred_check
        _
      $region10: #{tpu_custom_call.1} parent=5 // pred_check_branch
        %128 = sbr.rel (%p125) target = $region12
      $region11: #{tpu_custom_call.1} parent=5 // pred_region
        %s129 = ssub.s32 %s9, 1
      $region12: #{tpu_custom_call.1} parent=5 // pred_fallthru
        _
      %p130 = scmp.lt.s32.totalorder %s9, 4
      // Predicated region
      $region13: #{tpu_custom_call.1} parent=5 // pred_check
        %p131 = pneg %p130
      $region14: #{tpu_custom_call.1} parent=5 // pred_check_branch
        %133 = sbr.rel (%p131) target = $region16
      $region15: #{tpu_custom_call.1} parent=5 // pred_region
        // Predicated region
        $region17: #{tpu_custom_call.1} parent=15 // pred_check
          %p134 = pneg %p49
        $region18: #{tpu_custom_call.1} parent=15 // pred_check_branch
          %136 = sbr.rel (%p134) target = $region20
        $region19: #{tpu_custom_call.1} parent=15 // pred_region
          %s137 = smul.u32 %s16, 4
          %s138 = sadd.s32 %s137, %s17
          %p139 = scmp.lt.s32.totalorder %s138, 3
          %s140 = scalar_select %p139, %s138, 3
          %s141 = smul.u32 2, %s140
          %p142 = scmp.lt.s32.totalorder %s141, 7
          %s143 = scalar_select %p142, %s141, 7
          %s144 = smul.addr %s143, 8
          %s145 = scalar_lea.vmem %s0, %s144
          %s146 = smul.u32 %s16, 4
          %s147 = sadd.s32 %s146, %s17
          %p148 = scmp.lt.s32.totalorder %s147, 3
          %s149 = scalar_select %p148, %s147, 3
          %s150 = smul.u32 2, %s149
        $region20: #{tpu_custom_call.1} parent=15 // pred_fallthru
          _
        // Predicated region
        $region21: #{tpu_custom_call.1} parent=15 // pred_check
          %p151 = pneg %p83
        $region22: #{tpu_custom_call.1} parent=15 // pred_check_branch
          %153 = sbr.rel (%p151) target = $region24
        $region23: #{tpu_custom_call.1} parent=15 // pred_region
          %s154 = smul.u32 %s16, 4
          %s155 = sadd.s32 %s154, %s17
          %p156 = scmp.lt.s32.totalorder %s155, 3
          %s157 = scalar_select %p156, %s155, 3
          %s158 = smul.u32 2, %s157
          %p159 = scmp.lt.s32.totalorder %s158, 7
          %s160 = scalar_select %p159, %s158, 7
          %s161 = smul.addr %s160, 8
          %s162 = scalar_lea.vmem %s1, %s161
          %s163 = smul.u32 %s16, 4
          %s164 = sadd.s32 %s163, %s17
          %p165 = scmp.lt.s32.totalorder %s164, 3
          %s166 = scalar_select %p165, %s164, 3
          %s167 = smul.u32 2, %s166
        $region24: #{tpu_custom_call.1} parent=15 // pred_fallthru
          _
      $region16: #{tpu_custom_call.1} parent=5 // pred_fallthru
        _
      %p168 = scmp.le.s32.totalorder 1, %s9
      %p169 = scmp.lt.s32.totalorder %s9, 5
      %p170 = pnand %p168, %p169
      %p171 = pneg %p170
      // Predicated region
      $region25: #{tpu_custom_call.1} parent=5 // pred_check
        _
      $region26: #{tpu_custom_call.1} parent=5 // pred_check_branch
        %173 = sbr.rel (%p170) target = $region28
      $region27: #{tpu_custom_call.1} parent=5 // pred_region
        %s174 = ssub.s32 %s9, 1
        %s175 = smul.u32 %s18, 4
        %s176 = sadd.s32 %s175, %s19
        %p177 = scmp.lt.s32.totalorder %s176, 3
        %s178 = scalar_select %p177, %s176, 3
        %s179 = smul.u32 2, %s178
        %p180 = scmp.lt.s32.totalorder %s179, 7
        %s181 = scalar_select %p180, %s179, 7
        %s182 = smul.addr %s181, 8
        %s183 = scalar_lea.vmem %s0, %s182
        %p184 = pneg %p55
        %p185 = pneg %p52
        %s186 = smul.u32 %s18, 4
        %s187 = sadd.s32 %s186, %s19
        %p188 = scmp.lt.s32.totalorder %s187, 3
        %s189 = scalar_select %p188, %s187, 3
        %s190 = smul.u32 2, %s189
        %p191 = scmp.lt.s32.totalorder %s190, 7
        %s192 = scalar_select %p191, %s190, 7
        %s193 = smul.addr %s192, 8
        %s194 = scalar_lea.vmem %s1, %s193
        %p195 = pneg %p89
        %p196 = pneg %p86
        %p197 = pneg %p115
        %p198 = pneg %p112
        %s199 = smul.u32 %s18, 4
        %s200 = sadd.s32 %s199, %s19
        %p201 = scmp.lt.s32.totalorder %s200, 3
        %s202 = scalar_select %p201, %s200, 3
        %s203 = smul.u32 2, %s202
        %p204 = scmp.lt.s32.totalorder %s203, 7
        %s205 = scalar_select %p204, %s203, 7
        %s206 = smul.addr %s205, 8
        %s207 = scalar_lea.vmem %s0, %s206
        %s208 = smul.u32 %s18, 4
        %s209 = sadd.s32 %s208, %s19
        %p210 = scmp.lt.s32.totalorder %s209, 3
        %s211 = scalar_select %p210, %s209, 3
        %s212 = smul.u32 2, %s211
        %s213 = smul.u32 %s18, 4
        %s214 = sadd.s32 %s213, %s19
        %p215 = scmp.lt.s32.totalorder %s214, 3
        %s216 = scalar_select %p215, %s214, 3
        %s217 = smul.u32 2, %s216
        %p218 = scmp.lt.s32.totalorder %s217, 7
        %s219 = scalar_select %p218, %s217, 7
        %s220 = smul.addr %s219, 8
        %s221 = scalar_lea.vmem %s1, %s220
        %s222 = smul.u32 %s18, 4
        %s223 = sadd.s32 %s222, %s19
        %p224 = scmp.lt.s32.totalorder %s223, 3
        %s225 = scalar_select %p224, %s223, 3
        %s226 = smul.u32 2, %s225
        %p227 = scmp.eq.s32.totalorder %s19, 0
        // Predicated region
        $region29: #{tpu_custom_call.1} parent=27 // pred_check
          %p228 = pneg %p227
        $region30: #{tpu_custom_call.1} parent=27 // pred_check_branch
          %230 = sbr.rel (%p228) target = $region32
        $region31: #{tpu_custom_call.1} parent=27 // pred_region
          %231 = vst [vmem:[#allocation2] sm:$0xff] 0.0
        $region32: #{tpu_custom_call.1} parent=27 // pred_fallthru
          _
        %v232 = vld [vmem:[%s207] sm:$0xff]
        %v233 = vld [vmem:[%s207 + $0x8] sm:$0xff]
        %v234 = vld [vmem:[%s221] sm:$0xff]
        %v235 = vld [vmem:[%s221 + $0x8] sm:$0xff]
        %vm236 = vcmask 506880
        %v237 = vsel %vm236, %v232, -inf
        %238 = vmax.xlane.f32.xlu0 %v237
        %v239 = vpop.xlane.xlu0 %238
        %v240 = vsel %vm236, %v233, -inf
        %241 = vmax.xlane.f32.xlu0 %v240
        %v242 = vpop.xlane.xlu0 %241
        %v243 = vsub.f32 %v232, %v239
        %v244 = vsub.f32 %v233, %v242
        %v245 = vmul.f32 %v243, 1.442695
        %v246 = vpow.pop %v245
        %v247 = vmul.f32 %v244, 1.442695
        %v248 = vpow.pop %v247
        %v249 = vsel %vm236, %v246, 0.0
        %250 = vadd.xlane.f32.xlu0 %v249
        %v251 = vpop.xlane.xlu0 %250
        %v252 = vsel %vm236, %v248, 0.0
        %253 = vadd.xlane.f32.xlu0 %v252
        %v254 = vpop.xlane.xlu0 %253
        %v255 = vlog2.pop %v251
        %v256 = vmul.f32 %v255, 0.6931472
        %v257 = vlog2.pop %v254
        %v258 = vmul.f32 %v257, 0.6931472
        %v259 = vlaneseq
        %v260 = vand.u32 %v259, 127
        %261 = vset.pattern.permute.xlu0 0
        %262 = vperm.xlu0 %261, %v234
        %v263 = vpop.permute.xlu0 %262
        %264 = vset.pattern.permute.xlu0 0
        %265 = vperm.xlu0 %264, %v235
        %v266 = vpop.permute.xlu0 %265
        %vm267 = vcmp.eq.s32.totalorder %v260, %v263
        %vm268 = vcmp.eq.s32.totalorder %v260, %v266
        %v269 = vsel %vm267, %v243, 0.0
        %v270 = vsel %vm268, %v244, 0.0
        %v271 = vsel %vm236, %v269, 0.0
        %272 = vadd.xlane.f32.xlu0 %v271
        %v273 = vpop.xlane.xlu0 %272
        %v274 = vsel %vm236, %v270, 0.0
        %275 = vadd.xlane.f32.xlu0 %v274
        %v276 = vpop.xlane.xlu0 %275
        %v277 = vsub.f32 %v256, %v273
        %v278 = vsub.f32 %v258, %v276
        %s279 = smul.u32 %s18, 4
        %s280 = sadd.s32 %s279, %s19
        %s281 = smul.u32 %s280, 16
        %v282 = vlaneseq
        %v283 = vshrl.u32 %v282, 7
        %v284 = vadd.s32 %v283, 8
        %v285 = vstv %s281
        %v286 = vadd.s32 %v285, %v283
        %v287 = vadd.s32 %v285, %v284
        %vm288 = vcmp.lt.s32.totalorder %v286, 64
        %vm289 = vcmp.lt.s32.totalorder %v287, 64
        %v290 = vsel %vm288, %v277, 0.0
        %v291 = vsel %vm289, %v278, 0.0
        %vm292 = vcmask 7168
        %v293 = vsel %vm292, %v290, 0.0
        %v294 = vsel %vm292, %v291, 0.0
        %v295 = vadd.f32 %v293, %v294
        %296 = vadd.xlane.f32.xlu0 %v295
        %v297 = vpop.xlane.xlu0 %296
        %v298 = vrot.slane %v297, 4
        %v299 = vadd.f32 %v297, %v298
        %v300 = vrot.slane %v299, 2
        %v301 = vadd.f32 %v299, %v300
        %v302 = vrot.slane %v301, 1
        %v303 = vadd.f32 %v301, %v302
        %s304 = vtos %v303
        %s305 = smul.f32 %s304, 0.015625
        %v306 = vld [vmem:[#allocation2] sm:$0xff]
        %v307 = vstv %s305
        %v308 = vadd.f32 %v306, %v307
        %309 = vst [vmem:[#allocation2] sm:$0xff] %v308
        // Predicated region
        $region33: #{tpu_custom_call.1} parent=27 // pred_check
          %p310 = pneg %p112
        $region34: #{tpu_custom_call.1} parent=27 // pred_check_branch
          %312 = sbr.rel (%p310) target = $region36
        $region35: #{tpu_custom_call.1} parent=27 // pred_region
          %s314 = ssub.s32 128, 128
          %315 = vsyncadd [#allocation3], %s314
          %s316 = smul.addr %s18, 128
          %s317 = scalar_lea.hbm %s2, %s316
          %s319 = sshll.u32 [#allocation2], 4
          %s320 = int_to_ptr.vmem [resolvable:$true] %s319
          %322 = dma.vmem_to_hbm [thread:$0]  %s320, 128, %s317, [#allocation3]
        $region36: #{tpu_custom_call.1} parent=27 // pred_fallthru
          _
        // Predicated region
        $region37: #{tpu_custom_call.1} parent=27 // pred_check
          %p323 = pneg %p112
        $region38: #{tpu_custom_call.1} parent=27 // pred_check_branch
          %325 = sbr.rel (%p323) target = $region40
        $region39: #{tpu_custom_call.1} parent=27 // pred_region
          %326 = dma.done [#allocation3], 128
        $region40: #{tpu_custom_call.1} parent=27 // pred_fallthru
          _
      $region28: #{tpu_custom_call.1} parent=5 // pred_fallthru
        _
      %p327 = scmp.le.s32.totalorder 2, %s9
      // Predicated region
      $region41: #{tpu_custom_call.1} parent=5 // pred_check
        %p328 = pneg %p327
      $region42: #{tpu_custom_call.1} parent=5 // pred_check_branch
        %330 = sbr.rel (%p328) target = $region44
      $region43: #{tpu_custom_call.1} parent=5 // pred_region
        %s331 = ssub.s32 %s9, 2
      $region44: #{tpu_custom_call.1} parent=5 // pred_fallthru
        _
    $region6: #{tpu_custom_call.1} parent=1 // loop_footer
      %s13 = sadd.s32 1, %s9
    $region7: #{tpu_custom_call.1} parent=1 // loop_footer_branch
      %8 = sbr.rel target = $region3
    $region8: #{tpu_custom_call.1} parent=1 // loop_exit
      _
    %332 = vsyncpa [#allocation3], 1
    %s333 = scalar_lea.sflag [#allocation3], 1
    %334 = vsyncpa %s333, 1

</llo_original>
